<compile_context>
chip_gen: v7x
topology: tpu7x:2x2x1
jax: 0.10.0
libtpu: 0.0.40
codegen_flags: <defaults>
</compile_context>

<pallas_src>
import functools

import jax
import jax.numpy as jnp
from jax import lax
from jax.experimental import pallas as pl
from jax.experimental.pallas import tpu as pltpu

_EPS = 1e-12                     # matches torch.nn.functional.normalize default
_SMALL_INPUT_BYTES = 512 << 10   # below this, plain jnp beats kernel-launch cost


def _round_up(x, m):
    return ((x + m - 1) // m) * m


def _cdiv(a, b):
    return -(-a // b)


def _num_tensorcores():
    """2 on dual-TensorCore chips (v7x-class); 1 on single-TC v5e/v6e."""
    try:
        kind = jax.devices()[0].device_kind.lower()
    except Exception:
        return 1
    return 2 if "v7" in kind else 1


def _pick_tile_d(B, D, itemsize):
    """Lane tile: ~2 MiB per-input per-step DMA, multiple of 128, VMEM-capped."""
    t = max(512, (2 << 20) // max(1, B * itemsize))            # ~2 MiB DMA target
    # keep double-buffered inputs (2 arrays x 2 buffers) <= ~8 MiB total
    cap = max(128, ((8 << 20) // max(1, 4 * B * itemsize)) // 128 * 128)
    t = min(_round_up(t, 128), cap)
    t = min(t, _round_up(D, 128))                              # never wider than D
    return max(t, 128)


# ------------------------------ kernel -------------------------------------
def _gram_kernel(p_ref, s_ref, gp_ref, gs_ref, *, true_d, tile_d, needs_mask):
    """Accumulate raw Grams G = X X^T over lane tiles of X (f32 accumulation)."""
    @pl.when(pl.program_id(1) == 0)
    def _():
        gp_ref[...] = jnp.zeros_like(gp_ref)
        gs_ref[...] = jnp.zeros_like(gs_ref)

    p = p_ref[...]                                   # (B, tile_d), native dtype
    s = s_ref[...]
    if needs_mask:
        # Zero the out-of-bounds tail lanes of the (single) partial tile; on
        # full tiles the predicate is all-true and the VPU ops hide under DMA.
        # (OOB lanes of a partial block are garbage -> mask the operands.)
        tile_idx = pl.program_id(0) * pl.num_programs(1) + pl.program_id(1)
        rem = true_d - tile_idx * tile_d
        lane = lax.broadcasted_iota(jnp.int32, p.shape, 1)
        keep = lane < rem
        p = jnp.where(keep, p, jnp.zeros((), p.dtype))
        s = jnp.where(keep, s, jnp.zeros((), s.dtype))

    # Contract the feature (lane) axis without an explicit transpose.
    dn = (((1,), (1,)), ((), ()))
    gp_ref[0] += lax.dot_general(p, p, dimension_numbers=dn,
                                 preferred_element_type=jnp.float32)
    gs_ref[0] += lax.dot_general(s, s, dimension_numbers=dn,
                                 preferred_element_type=jnp.float32)


def _raw_grams(p, s):
    """One fused pallas_call: per-split partial G_p = P P^T and G_s = S S^T."""
    B, D = p.shape
    itemsize = max(p.dtype.itemsize, s.dtype.itemsize)
    tile_d = _pick_tile_d(B, D, itemsize)

    total_tiles = _cdiv(D, tile_d)
    splits = _num_tensorcores()
    # Only split when each core actually gets >= 2 steps and the tiles divide
    # evenly; otherwise the split is pure overhead (extra init/writeback).
    if splits > 1 and (total_tiles < 2 * splits or total_tiles % splits != 0):
        splits = 1
    steps = total_tiles // splits
    needs_mask = (D % tile_d) != 0

    in_map = lambda c, k: (0, c * steps + k)         # contiguous range per split

    vmem_est = (2 * 2 * B * tile_d * itemsize        # 2 inputs, double-buffered
                + 2 * 2 * B * B * 4)                 # 2 x (1,B,B) f32 outputs
    vmem_limit = int(min(max(2 * vmem_est + (2 << 20), 16 << 20), 48 << 20))

    kernel = functools.partial(_gram_kernel, true_d=D, tile_d=tile_d,
                               needs_mask=needs_mask)

    gp_parts, gs_parts = pl.pallas_call(
        kernel,
        out_shape=(jax.ShapeDtypeStruct((splits, B, B), jnp.float32),
                   jax.ShapeDtypeStruct((splits, B, B), jnp.float32)),
        grid=(splits, steps),
        in_specs=[pl.BlockSpec((B, tile_d), in_map),
                  pl.BlockSpec((B, tile_d), in_map)],
        out_specs=(pl.BlockSpec((1, B, B), lambda c, k: (c, 0, 0)),
                   pl.BlockSpec((1, B, B), lambda c, k: (c, 0, 0))),
        compiler_params=pltpu.CompilerParams(
            dimension_semantics=("parallel", "arbitrary"),
            vmem_limit_bytes=vmem_limit),
        cost_estimate=pl.CostEstimate(
            flops=4 * B * B * total_tiles * tile_d,
            transcendentals=0,
            bytes_accessed=2 * B * D * itemsize + 2 * splits * B * B * 4),
    )(p, s)
    return gp_parts.sum(axis=0), gs_parts.sum(axis=0)


# --------------------------- tiny B x B glue --------------------------------
def _normalized_gram(g, B):
    """From raw Gram G = X X^T, build Gn = Xn Xn^T where Xn is the
    batch-centered, row-L2-normalized X (eps = 1e-12 as in F.normalize)."""
    r = jnp.sum(g, axis=1, keepdims=True)                  # G @ 1
    t = jnp.sum(g)                                         # 1^T G 1
    gc = g - r / B - jnp.transpose(r) / B + t / (B * B)    # H G H
    norms = jnp.sqrt(jnp.maximum(jnp.diagonal(gc), 0.0))
    inv = 1.0 / jnp.maximum(norms, _EPS)
    return gc * inv[:, None] * inv[None, :]


def _small_fallback(p, s, weight):
    """Tiny-problem path: center/normalize exactly, then B x B Grams."""
    B, D = p.shape
    pf = p.astype(jnp.float32)
    sf = s.astype(jnp.float32)
    pf = pf - jnp.mean(pf, axis=0, keepdims=True)
    sf = sf - jnp.mean(sf, axis=0, keepdims=True)
    pn = pf / jnp.maximum(jnp.linalg.norm(pf, axis=1, keepdims=True), _EPS)
    sn = sf / jnp.maximum(jnp.linalg.norm(sf, axis=1, keepdims=True), _EPS)
    return jnp.sum((pn @ pn.T) * (sn @ sn.T)) * (jnp.float32(weight) / (D * D))


def diff_loss_tf_trans(private_samples, shared_samples, weight=1.0, *,
                       force_pallas=None):
    B = private_samples.shape[0]
    p = jnp.reshape(private_samples, (B, -1))
    s = jnp.reshape(shared_samples, (B, -1))
    # Keep native low-precision float dtypes (bf16/f32) -- no HBM upcast copy.
    if p.dtype not in (jnp.bfloat16, jnp.float32):
        p = p.astype(jnp.float32)
    if s.dtype not in (jnp.bfloat16, jnp.float32):
        s = s.astype(jnp.float32)
    D = p.shape[1]

    itemsize = max(p.dtype.itemsize, s.dtype.itemsize)
    tiny = (2 * B * D * itemsize) < _SMALL_INPUT_BYTES
    use_pallas = (not tiny) if force_pallas is None else bool(force_pallas)
    if not use_pallas:
        return _small_fallback(p, s, weight)

    # NOTE: centering the Gram after the fact (raw-moment trick) can lose a few
    # digits in f32 when per-feature means dominate the centered variance; for
    # a regularization loss this is acceptable.
    gp, gs = _raw_grams(p, s)
    gpn = _normalized_gram(gp, B)
    gsn = _normalized_gram(gs, B)

    # mean over the D x D cross-correlation entries, times weight.
    return jnp.sum(gpn * gsn) * (jnp.float32(weight) / jnp.float32(D) / jnp.float32(D))


# ----------------------------- reference ------------------------------------
def _reference(private_samples, shared_samples, weight=1.0):
    B = private_samples.shape[0]
    p = jnp.reshape(private_samples, (B, -1)).astype(jnp.float32)
    s = jnp.reshape(shared_samples, (B, -1)).astype(jnp.float32)
    p = p - jnp.mean(p, axis=0, keepdims=True)
    s = s - jnp.mean(s, axis=0, keepdims=True)
    pn = p / jnp.maximum(jnp.linalg.norm(p, axis=1, keepdims=True), _EPS)
    sn = s / jnp.maximum(jnp.linalg.norm(s, axis=1, keepdims=True), _EPS)
    c = pn.T @ sn
    return jnp.mean(c ** 2) * weight


if __name__ == "__main__":
    key = jax.random.PRNGKey(0)
    k1, k2 = jax.random.split(key)
    # NCHW inputs, as a transformer/conv feature map would supply.
    private = jax.random.normal(k1, (2, 4, 16, 16), dtype=jnp.float32)
    shared = jax.random.normal(k2, (2, 4, 16, 16), dtype=jnp.float32)

    ref = jax.block_until_ready(_reference(private, shared, weight=1.0))

    # Pallas kernel path (forced, since this harness shape is below the
    # tiny-problem cutoff).
    out = jax.block_until_ready(
        diff_loss_tf_trans(private, shared, 1.0, force_pallas=True))
    assert jnp.allclose(out, ref, rtol=1e-5, atol=1e-6), (out, ref)

    # Auto path (tiny -> jnp fallback) must agree as well.
    out2 = jax.block_until_ready(diff_loss_tf_trans(private, shared, 1.0))
    assert jnp.allclose(out2, ref, rtol=1e-5, atol=1e-6), (out2, ref)

    print("KERNEL_OK")
</pallas_src>

<mosaic_0001>
module attributes {stable_mosaic.version = 11 : i64} {
  func.func @_gram_kernel(%arg0: i32, %arg1: i32, %arg2: memref<2x1024xf32, #tpu.memory_space<vmem>>, %arg3: memref<2x1024xf32, #tpu.memory_space<vmem>>, %arg4: memref<1x2x2xf32, #tpu.memory_space<vmem>>, %arg5: memref<1x2x2xf32, #tpu.memory_space<vmem>>) attributes {dimension_semantics = [#tpu.dimension_semantics<parallel>, #tpu.dimension_semantics<arbitrary>], iteration_bounds = array<i64: 1, 1>, scalar_prefetch = 0 : i64, scratch_operands = 0 : i64, tpu.core_type = #tpu.core_type<tc>, window_params = [{transform_indices = @transform_0, window_bounds = array<i64: 2, 1024>}, {transform_indices = @transform_1, window_bounds = array<i64: 2, 1024>}, {transform_indices = @transform_2, window_bounds = array<i64: 1, 2, 2>}, {transform_indices = @transform_3, window_bounds = array<i64: 1, 2, 2>}]} {
    %c0_i32 = arith.constant 0 : i32
    %0 = arith.cmpi eq, %arg1, %c0_i32 : i32
    %1 = arith.extui %0 : i1 to i32
    %c0_i32_0 = arith.constant 0 : i32
    %2 = arith.cmpi ne, %1, %c0_i32_0 : i32
    scf.if %2 {
      %cst_17 = arith.constant 0.000000e+00 : f32
      %19 = vector.broadcast %cst_17 : f32 to vector<1x2x2xf32>
      %c0_18 = arith.constant 0 : index
      %c0_19 = arith.constant 0 : index
      %c0_20 = arith.constant 0 : index
      %20 = vector.load %arg4[%c0_18, %c0_19, %c0_20] : memref<1x2x2xf32, #tpu.memory_space<vmem>>, vector<1x2x2xf32>
      tpu.vector_store %arg4[%c0_18, %c0_19, %c0_20], %19 {strides = array<i32>} : memref<1x2x2xf32, #tpu.memory_space<vmem>>, vector<1x2x2xf32>,
      %cst_21 = arith.constant 0.000000e+00 : f32
      %21 = vector.broadcast %cst_21 : f32 to vector<1x2x2xf32>
      %c0_22 = arith.constant 0 : index
      %c0_23 = arith.constant 0 : index
      %c0_24 = arith.constant 0 : index
      %22 = vector.load %arg5[%c0_22, %c0_23, %c0_24] : memref<1x2x2xf32, #tpu.memory_space<vmem>>, vector<1x2x2xf32>
      tpu.vector_store %arg5[%c0_22, %c0_23, %c0_24], %21 {strides = array<i32>} : memref<1x2x2xf32, #tpu.memory_space<vmem>>, vector<1x2x2xf32>,
    } else {
    }
    %c0 = arith.constant 0 : index
    %c0_1 = arith.constant 0 : index
    %3 = vector.load %arg2[%c0, %c0_1] : memref<2x1024xf32, #tpu.memory_space<vmem>>, vector<2x1024xf32>
    %c0_2 = arith.constant 0 : index
    %c0_3 = arith.constant 0 : index
    %4 = vector.load %arg3[%c0_2, %c0_3] : memref<2x1024xf32, #tpu.memory_space<vmem>>, vector<2x1024xf32>
    %c0_4 = arith.constant 0 : index
    %c0_5 = arith.constant 0 : index
    %c0_6 = arith.constant 0 : index
    %5 = vector.load %arg4[%c0_4, %c0_5, %c0_6] : memref<1x2x2xf32, #tpu.memory_space<vmem>>, vector<1x2x2xf32>
    %6 = vector.shape_cast %5 : vector<1x2x2xf32> to vector<2x2xf32>
    %cst = arith.constant dense<0.000000e+00> : vector<2x2xf32>
    %7 = tpu.matmul %3, %3, %cst {dimension_numbers = #tpu.dot_dimension_numbers<[1], [1], [0], [0], [0, 0, 1, 0], [], []>} : vector<2x1024xf32>, vector<2x1024xf32>, vector<2x2xf32> -> vector<2x2xf32>
    %8 = arith.addf %6, %7 : vector<2x2xf32>
    %c0_7 = arith.constant 0 : index
    %c0_8 = arith.constant 0 : index
    %c0_9 = arith.constant 0 : index
    %9 = vector.load %arg4[%c0_7, %c0_8, %c0_9] : memref<1x2x2xf32, #tpu.memory_space<vmem>>, vector<1x2x2xf32>
    %10 = vector.shape_cast %9 : vector<1x2x2xf32> to vector<2x2xf32>
    %11 = vector.shape_cast %8 : vector<2x2xf32> to vector<1x2x2xf32>
    tpu.vector_store %arg4[%c0_7, %c0_8, %c0_9], %11 {strides = array<i32>} : memref<1x2x2xf32, #tpu.memory_space<vmem>>, vector<1x2x2xf32>,
    %c0_10 = arith.constant 0 : index
    %c0_11 = arith.constant 0 : index
    %c0_12 = arith.constant 0 : index
    %12 = vector.load %arg5[%c0_10, %c0_11, %c0_12] : memref<1x2x2xf32, #tpu.memory_space<vmem>>, vector<1x2x2xf32>
    %13 = vector.shape_cast %12 : vector<1x2x2xf32> to vector<2x2xf32>
    %cst_13 = arith.constant dense<0.000000e+00> : vector<2x2xf32>
    %14 = tpu.matmul %4, %4, %cst_13 {dimension_numbers = #tpu.dot_dimension_numbers<[1], [1], [0], [0], [0, 0, 1, 0], [], []>} : vector<2x1024xf32>, vector<2x1024xf32>, vector<2x2xf32> -> vector<2x2xf32>
    %15 = arith.addf %13, %14 : vector<2x2xf32>
    %c0_14 = arith.constant 0 : index
    %c0_15 = arith.constant 0 : index
    %c0_16 = arith.constant 0 : index
    %16 = vector.load %arg5[%c0_14, %c0_15, %c0_16] : memref<1x2x2xf32, #tpu.memory_space<vmem>>, vector<1x2x2xf32>
    %17 = vector.shape_cast %16 : vector<1x2x2xf32> to vector<2x2xf32>
    %18 = vector.shape_cast %15 : vector<2x2xf32> to vector<1x2x2xf32>
    tpu.vector_store %arg5[%c0_14, %c0_15, %c0_16], %18 {strides = array<i32>} : memref<1x2x2xf32, #tpu.memory_space<vmem>>, vector<1x2x2xf32>,
    return
  }
  func.func @transform_0(%arg0: i32, %arg1: i32) -> (i32, i32) {
    %c1_i32 = arith.constant 1 : i32
    %0 = arith.muli %arg0, %c1_i32 : i32
    %1 = arith.addi %0, %arg1 : i32
    %c0_i32 = arith.constant 0 : i32
    %c0_i32_0 = arith.constant 0 : i32
    return %c0_i32, %1 : i32, i32
  }
  func.func @transform_1(%arg0: i32, %arg1: i32) -> (i32, i32) {
    %c1_i32 = arith.constant 1 : i32
    %0 = arith.muli %arg0, %c1_i32 : i32
    %1 = arith.addi %0, %arg1 : i32
    %c0_i32 = arith.constant 0 : i32
    %c0_i32_0 = arith.constant 0 : i32
    return %c0_i32, %1 : i32, i32
  }
  func.func @transform_2(%arg0: i32, %arg1: i32) -> (i32, i32, i32) {
    %c0_i32 = arith.constant 0 : i32
    %c0_i32_0 = arith.constant 0 : i32
    %c0_i32_1 = arith.constant 0 : i32
    return %arg0, %c0_i32, %c0_i32_0 : i32, i32, i32
  }
  func.func @transform_3(%arg0: i32, %arg1: i32) -> (i32, i32, i32) {
    %c0_i32 = arith.constant 0 : i32
    %c0_i32_0 = arith.constant 0 : i32
    %c0_i32_1 = arith.constant 0 : i32
    return %arg0, %c0_i32, %c0_i32_0 : i32, i32, i32
  }
}

</mosaic_0001>

<llo_original>
// kernel: tpu_custom_call.1
$region0: #{tpu_custom_call.1}
  #allocation0 [shape = 'u32[]', space=smem, size = 0x4, offset = 0x4, fixed_abs, tag = 'smem constant byte address 0x4 - core index']
  #allocation1 [shape = 'u32[144,128]{1,0:T(1,128)}', space=vmem, size = 0x12000, scoped, tag = 'internal scratch']
  %s0 = inlined_call_operand.hbm [shape: f32[2,1024], index: 0, kind: input, shape index: {}]
  %s1 = inlined_call_operand.hbm [shape: f32[2,1024], index: 1, kind: input, shape index: {}]
  %s2 = inlined_call_operand.hbm [shape: f32[1,2,2], index: 2, kind: output, shape index: {0}]
  %s3 = inlined_call_operand.hbm [shape: f32[1,2,2], index: 3, kind: output, shape index: {1}]
  %4 = xla_tuple %s2, %s3
  %s5 = sld [smem:[#allocation0]]
  $region38: #{tpu_custom_call.1} parent=0
    _
  %s7 = ssub.s32 1, %s5
  %s8 = scalar_select 0, %s7, %s5
  $region1: #{tpu_custom_call.1} parent=0
    #allocation2 [shape = 'u8[8192]{0}', space=vmem, size = 0x2000, scoped, tag = 'input window, operand 0, single buffered']
    #allocation3 [shape = 's32[1]{0}', space=sflag, size = 0x4, scoped, tag = 'scoped memory for tpu_custom_call.1']
    #allocation4 [shape = 's32[1]{0}', space=sflag, size = 0x4, scoped, tag = 'scoped memory for tpu_custom_call.1']
    #allocation5 [shape = 'u8[8192]{0}', space=vmem, size = 0x2000, scoped, tag = 'input window, operand 1, single buffered']
    #allocation6 [shape = 's32[1]{0}', space=sflag, size = 0x4, scoped, tag = 'scoped memory for tpu_custom_call.1']
    #allocation7 [shape = 'u8[1024]{0}', space=vmem, size = 0x400, scoped, tag = 'output window, operand 0, single buffered']
    #allocation8 [shape = 'u8[1024]{0}', space=vmem, size = 0x400, scoped, tag = 'output window, operand 1, single buffered']
    #allocation9 [shape = 's32[1]{0}', space=sflag, size = 0x4, scoped, tag = 'scoped memory for tpu_custom_call.1']
    %9 = vsyncpa [#allocation3], 0
    %10 = vsyncpa [#allocation6], 0
    %11 = vsyncpa [#allocation4], 0
    %12 = vsyncpa [#allocation9], 0
    // Predicated region
    $region2: #{tpu_custom_call.1} parent=1 // pred_check
      _
    $region3: #{tpu_custom_call.1} parent=1 // pred_check_branch
      %14 = sbr.rel (0) target = $region5
    $region4: #{tpu_custom_call.1} parent=1 // pred_region
      %s15 = sadd.s32 0, 0
      %s16 = smul.u32 8, %s15
      %s18 = ssub.s32 256, 256
      %19 = vsyncadd [#allocation3], %s18
      %s20 = smul.addr %s16, 32
      %s21 = scalar_lea.hbm %s0, %s20
      %s23 = sshll.u32 [#allocation2], 4
      %s24 = int_to_ptr.vmem [resolvable:$true] %s23
      %26 = dma.hbm_to_vmem [thread:$0]  %s21, 256, %s24, [#allocation3]
    $region5: #{tpu_custom_call.1} parent=1 // pred_fallthru
      _
    // Predicated region
    $region6: #{tpu_custom_call.1} parent=1 // pred_check
      _
    $region7: #{tpu_custom_call.1} parent=1 // pred_check_branch
      %28 = sbr.rel (0) target = $region9
    $region8: #{tpu_custom_call.1} parent=1 // pred_region
      %s29 = sadd.s32 0, 0
      %s30 = smul.u32 8, %s29
      %s32 = ssub.s32 256, 256
      %33 = vsyncadd [#allocation6], %s32
      %s34 = smul.addr %s30, 32
      %s35 = scalar_lea.hbm %s1, %s34
      %s37 = sshll.u32 [#allocation5], 4
      %s38 = int_to_ptr.vmem [resolvable:$true] %s37
      %40 = dma.hbm_to_vmem [thread:$0]  %s35, 256, %s38, [#allocation6]
    $region9: #{tpu_custom_call.1} parent=1 // pred_fallthru
      _
    // Predicated region
    $region10: #{tpu_custom_call.1} parent=1 // pred_check
      _
    $region11: #{tpu_custom_call.1} parent=1 // pred_check_branch
      %42 = sbr.rel (0) target = $region13
    $region12: #{tpu_custom_call.1} parent=1 // pred_region
      %43 = dma.done [#allocation3], 256
    $region13: #{tpu_custom_call.1} parent=1 // pred_fallthru
      _
    // Predicated region
    $region14: #{tpu_custom_call.1} parent=1 // pred_check
      _
    $region15: #{tpu_custom_call.1} parent=1 // pred_check_branch
      %45 = sbr.rel (0) target = $region17
    $region16: #{tpu_custom_call.1} parent=1 // pred_region
      %46 = dma.done [#allocation6], 256
    $region17: #{tpu_custom_call.1} parent=1 // pred_fallthru
      _
    %s47 = sadd.s32 0, 0
    %s48 = smul.u32 8, %s47
    %s49 = sadd.s32 0, 0
    %s50 = smul.u32 8, %s49
    %p51 = scmp.eq.s32.totalorder 0, 0
    // Predicated region
    $region18: #{tpu_custom_call.1} parent=1 // pred_check
      %p52 = pneg %p51
    $region19: #{tpu_custom_call.1} parent=1 // pred_check_branch
      %54 = sbr.rel (%p52) target = $region21
    $region20: #{tpu_custom_call.1} parent=1 // pred_region
      %vm55 = vcmask 9216
      %56 = vst.msk [vmem:[#allocation7] sm:$0x3] %vm55, 0.0
      %57 = vst.msk [vmem:[#allocation8] sm:$0x3] %vm55, 0.0
    $region21: #{tpu_custom_call.1} parent=1 // pred_fallthru
      _
    %v58 = vld [vmem:[#allocation2] sm:$0xff]
    %v59 = vld [vmem:[#allocation2 + $0x8] sm:$0xff]
    %v60 = vld [vmem:[#allocation5] sm:$0xff]
    %v61 = vld [vmem:[#allocation5 + $0x8] sm:$0xff]
    %v62 = vld [vmem:[#allocation7] sm:$0x3]
    %v65 = vcombine.high %v58, %v58
    %v67 = vunpack.c.l.s4 1983009808
    %v68 = vunpack.c.0.s8 %v67
    %v69 = vlaneseq
    %v70 = vshrl.u32 %v69, 7
    %v71 = vsub.s32 %v68, %v70
    %v72 = vrot.slane %v58, %v71
    %v74 = vunpack.c.l.s4 1983009808
    %v75 = vunpack.c.0.s8 %v74
    %v76 = vlaneseq
    %v77 = vshrl.u32 %v76, 7
    %v78 = vsub.s32 %v75, %v77
    %v79 = vrot.slane %v65, %v78
    %v80 = vcombine.high %v72, %v72
    %v81 = vcombine.high %v79, %v79
    %v82 = vcombine.high %v59, %v59
    %v84 = vunpack.c.l.s4 1983009808
    %v85 = vunpack.c.0.s8 %v84
    %v86 = vlaneseq
    %v87 = vshrl.u32 %v86, 7
    %v88 = vsub.s32 %v85, %v87
    %v89 = vrot.slane %v59, %v88
    %v91 = vunpack.c.l.s4 1983009808
    %v92 = vunpack.c.0.s8 %v91
    %v93 = vlaneseq
    %v94 = vshrl.u32 %v93, 7
    %v95 = vsub.s32 %v92, %v94
    %v96 = vrot.slane %v82, %v95
    %v97 = vcombine.high %v89, %v89
    %v98 = vcombine.high %v96, %v96
    %107 = vmatprep.subr.mxu0 %v80
    %108 = vmatpush1.xpose.msra.mxu0 %v72
    %109 = vmatprep.subr.mxu0 0.0
    %110 = vmatpush1.xpose.msra.mxu0 0.0
    %111 = vmatprep.subr.mxu0 0.0
    %112 = vmatpush1.xpose.msra.mxu0 0.0
    %113 = vmatprep.subr.mxu0 0.0
    %114 = vmatpush1.xpose.msra.mxu0 0.0
    %115 = vmatprep.subr.mxu0 0.0
    %116 = vmatpush1.xpose.msra.mxu0 0.0
    %117 = vmatprep.subr.mxu0 0.0
    %118 = vmatpush1.xpose.msra.mxu0 0.0
    %119 = vmatprep.subr.mxu0 0.0
    %120 = vmatpush1.xpose.msra.mxu0 0.0
    %121 = vmatprep.subr.mxu0 0.0
    %122 = vmatpush1.xpose.msra.mxu0 0.0
    %123 = vmatprep.subr.mxu0 0.0
    %124 = vmatpush1.xpose.msra.mxu0 0.0
    %125 = vmatprep.subr.mxu0 0.0
    %126 = vmatpush1.xpose.msra.mxu0 0.0
    %127 = vmatprep.subr.mxu0 0.0
    %128 = vmatpush1.xpose.msra.mxu0 0.0
    %129 = vmatprep.subr.mxu0 0.0
    %130 = vmatpush1.xpose.msra.mxu0 0.0
    %131 = vmatprep.subr.mxu0 0.0
    %132 = vmatpush1.xpose.msra.mxu0 0.0
    %133 = vmatprep.subr.mxu0 0.0
    %134 = vmatpush1.xpose.msra.mxu0 0.0
    %135 = vmatprep.subr.mxu0 0.0
    %136 = vmatpush1.xpose.msra.mxu0 0.0
    %137 = vmatprep.subr.mxu0 0.0
    %138 = vmatpush1.xpose.msra.mxu0 0.0
    %139 = vmatprep.subr.mxu0 0.0
    %140 = vmatpush1.xpose.msra.mxu0 0.0
    %141 = vmatprep.subr.mxu0 0.0
    %142 = vmatpush1.xpose.msra.mxu0 0.0
    %143 = vmatprep.subr.mxu0 0.0
    %144 = vmatpush1.xpose.msra.mxu0 0.0
    %145 = vmatprep.subr.mxu0 0.0
    %146 = vmatpush1.xpose.msra.mxu0 0.0
    %147 = vmatprep.subr.mxu0 0.0
    %148 = vmatpush1.xpose.msra.mxu0 0.0
    %149 = vmatprep.subr.mxu0 0.0
    %150 = vmatpush1.xpose.msra.mxu0 0.0
    %151 = vmatprep.subr.mxu0 0.0
    %152 = vmatpush1.xpose.msra.mxu0 0.0
    %153 = vmatprep.subr.mxu0 0.0
    %154 = vmatpush1.xpose.msra.mxu0 0.0
    %155 = vmatprep.subr.mxu0 0.0
    %156 = vmatpush1.xpose.msra.mxu0 0.0
    %157 = vmatprep.subr.mxu0 0.0
    %158 = vmatpush1.xpose.msra.mxu0 0.0
    %159 = vmatprep.subr.mxu0 0.0
    %160 = vmatpush1.xpose.msra.mxu0 0.0
    %161 = vmatprep.subr.mxu0 0.0
    %162 = vmatpush1.xpose.msra.mxu0 0.0
    %163 = vmatprep.subr.mxu0 0.0
    %164 = vmatpush1.xpose.msra.mxu0 0.0
    %165 = vmatprep.subr.mxu0 0.0
    %166 = vmatpush1.xpose.msra.mxu0 0.0
    %167 = vmatprep.subr.mxu0 0.0
    %168 = vmatpush1.xpose.msra.mxu0 0.0
    %169 = vmatprep.subr.mxu0 0.0
    %170 = vmatpush1.xpose.msra.mxu0 0.0
    %171 = vmatprep.mubr.f32.mxu0 %v80
    %172 = vmatmul.mubr.f32.gmra.mrb[0].mxu0 %v72
    %v173 = vpop.f32.mrb[0].mxu0
    %v174 = vadd.f32 0.0, %v173
    %v175 = vpop.f32.mrb[0].mxu0
    %176 = vdwg.mxu0
    %177 = vmatprep.subr.mxu0 %v81
    %178 = vmatpush1.xpose.msra.mxu0 %v79
    %179 = vmatprep.subr.mxu0 0.0
    %180 = vmatpush1.xpose.msra.mxu0 0.0
    %181 = vmatprep.subr.mxu0 0.0
    %182 = vmatpush1.xpose.msra.mxu0 0.0
    %183 = vmatprep.subr.mxu0 0.0
    %184 = vmatpush1.xpose.msra.mxu0 0.0
    %185 = vmatprep.subr.mxu0 0.0
    %186 = vmatpush1.xpose.msra.mxu0 0.0
    %187 = vmatprep.subr.mxu0 0.0
    %188 = vmatpush1.xpose.msra.mxu0 0.0
    %189 = vmatprep.subr.mxu0 0.0
    %190 = vmatpush1.xpose.msra.mxu0 0.0
    %191 = vmatprep.subr.mxu0 0.0
    %192 = vmatpush1.xpose.msra.mxu0 0.0
    %193 = vmatprep.subr.mxu0 0.0
    %194 = vmatpush1.xpose.msra.mxu0 0.0
    %195 = vmatprep.subr.mxu0 0.0
    %196 = vmatpush1.xpose.msra.mxu0 0.0
    %197 = vmatprep.subr.mxu0 0.0
    %198 = vmatpush1.xpose.msra.mxu0 0.0
    %199 = vmatprep.subr.mxu0 0.0
    %200 = vmatpush1.xpose.msra.mxu0 0.0
    %201 = vmatprep.subr.mxu0 0.0
    %202 = vmatpush1.xpose.msra.mxu0 0.0
    %203 = vmatprep.subr.mxu0 0.0
    %204 = vmatpush1.xpose.msra.mxu0 0.0
    %205 = vmatprep.subr.mxu0 0.0
    %206 = vmatpush1.xpose.msra.mxu0 0.0
    %207 = vmatprep.subr.mxu0 0.0
    %208 = vmatpush1.xpose.msra.mxu0 0.0
    %209 = vmatprep.subr.mxu0 0.0
    %210 = vmatpush1.xpose.msra.mxu0 0.0
    %211 = vmatprep.subr.mxu0 0.0
    %212 = vmatpush1.xpose.msra.mxu0 0.0
    %213 = vmatprep.subr.mxu0 0.0
    %214 = vmatpush1.xpose.msra.mxu0 0.0
    %215 = vmatprep.subr.mxu0 0.0
    %216 = vmatpush1.xpose.msra.mxu0 0.0
    %217 = vmatprep.subr.mxu0 0.0
    %218 = vmatpush1.xpose.msra.mxu0 0.0
    %219 = vmatprep.subr.mxu0 0.0
    %220 = vmatpush1.xpose.msra.mxu0 0.0
    %221 = vmatprep.subr.mxu0 0.0
    %222 = vmatpush1.xpose.msra.mxu0 0.0
    %223 = vmatprep.subr.mxu0 0.0
    %224 = vmatpush1.xpose.msra.mxu0 0.0
    %225 = vmatprep.subr.mxu0 0.0
    %226 = vmatpush1.xpose.msra.mxu0 0.0
    %227 = vmatprep.subr.mxu0 0.0
    %228 = vmatpush1.xpose.msra.mxu0 0.0
    %229 = vmatprep.subr.mxu0 0.0
    %230 = vmatpush1.xpose.msra.mxu0 0.0
    %231 = vmatprep.subr.mxu0 0.0
    %232 = vmatpush1.xpose.msra.mxu0 0.0
    %233 = vmatprep.subr.mxu0 0.0
    %234 = vmatpush1.xpose.msra.mxu0 0.0
    %235 = vmatprep.subr.mxu0 0.0
    %236 = vmatpush1.xpose.msra.mxu0 0.0
    %237 = vmatprep.subr.mxu0 0.0
    %238 = vmatpush1.xpose.msra.mxu0 0.0
    %239 = vmatprep.subr.mxu0 0.0
    %240 = vmatpush1.xpose.msra.mxu0 0.0
    %241 = vmatprep.mubr.f32.mxu0 %v81
    %242 = vmatmul.mubr.f32.gmra.mrb[0].mxu0 %v79
    %v243 = vpop.f32.mrb[0].mxu0
    %v244 = vadd.f32 %v174, %v243
    %v245 = vpop.f32.mrb[0].mxu0
    %246 = vdwg.mxu0
    %247 = vmatprep.subr.mxu0 %v97
    %248 = vmatpush1.xpose.msra.mxu0 %v89
    %249 = vmatprep.subr.mxu0 0.0
    %250 = vmatpush1.xpose.msra.mxu0 0.0
    %251 = vmatprep.subr.mxu0 0.0
    %252 = vmatpush1.xpose.msra.mxu0 0.0
    %253 = vmatprep.subr.mxu0 0.0
    %254 = vmatpush1.xpose.msra.mxu0 0.0
    %255 = vmatprep.subr.mxu0 0.0
    %256 = vmatpush1.xpose.msra.mxu0 0.0
    %257 = vmatprep.subr.mxu0 0.0
    %258 = vmatpush1.xpose.msra.mxu0 0.0
    %259 = vmatprep.subr.mxu0 0.0
    %260 = vmatpush1.xpose.msra.mxu0 0.0
    %261 = vmatprep.subr.mxu0 0.0
    %262 = vmatpush1.xpose.msra.mxu0 0.0
    %263 = vmatprep.subr.mxu0 0.0
    %264 = vmatpush1.xpose.msra.mxu0 0.0
    %265 = vmatprep.subr.mxu0 0.0
    %266 = vmatpush1.xpose.msra.mxu0 0.0
    %267 = vmatprep.subr.mxu0 0.0
    %268 = vmatpush1.xpose.msra.mxu0 0.0
    %269 = vmatprep.subr.mxu0 0.0
    %270 = vmatpush1.xpose.msra.mxu0 0.0
    %271 = vmatprep.subr.mxu0 0.0
    %272 = vmatpush1.xpose.msra.mxu0 0.0
    %273 = vmatprep.subr.mxu0 0.0
    %274 = vmatpush1.xpose.msra.mxu0 0.0
    %275 = vmatprep.subr.mxu0 0.0
    %276 = vmatpush1.xpose.msra.mxu0 0.0
    %277 = vmatprep.subr.mxu0 0.0
    %278 = vmatpush1.xpose.msra.mxu0 0.0
    %279 = vmatprep.subr.mxu0 0.0
    %280 = vmatpush1.xpose.msra.mxu0 0.0
    %281 = vmatprep.subr.mxu0 0.0
    %282 = vmatpush1.xpose.msra.mxu0 0.0
    %283 = vmatprep.subr.mxu0 0.0
    %284 = vmatpush1.xpose.msra.mxu0 0.0
    %285 = vmatprep.subr.mxu0 0.0
    %286 = vmatpush1.xpose.msra.mxu0 0.0
    %287 = vmatprep.subr.mxu0 0.0
    %288 = vmatpush1.xpose.msra.mxu0 0.0
    %289 = vmatprep.subr.mxu0 0.0
    %290 = vmatpush1.xpose.msra.mxu0 0.0
    %291 = vmatprep.subr.mxu0 0.0
    %292 = vmatpush1.xpose.msra.mxu0 0.0
    %293 = vmatprep.subr.mxu0 0.0
    %294 = vmatpush1.xpose.msra.mxu0 0.0
    %295 = vmatprep.subr.mxu0 0.0
    %296 = vmatpush1.xpose.msra.mxu0 0.0
    %297 = vmatprep.subr.mxu0 0.0
    %298 = vmatpush1.xpose.msra.mxu0 0.0
    %299 = vmatprep.subr.mxu0 0.0
    %300 = vmatpush1.xpose.msra.mxu0 0.0
    %301 = vmatprep.subr.mxu0 0.0
    %302 = vmatpush1.xpose.msra.mxu0 0.0
    %303 = vmatprep.subr.mxu0 0.0
    %304 = vmatpush1.xpose.msra.mxu0 0.0
    %305 = vmatprep.subr.mxu0 0.0
    %306 = vmatpush1.xpose.msra.mxu0 0.0
    %307 = vmatprep.subr.mxu0 0.0
    %308 = vmatpush1.xpose.msra.mxu0 0.0
    %309 = vmatprep.subr.mxu0 0.0
    %310 = vmatpush1.xpose.msra.mxu0 0.0
    %311 = vmatprep.mubr.f32.mxu0 %v97
    %312 = vmatmul.mubr.f32.gmra.mrb[0].mxu0 %v89
    %v313 = vpop.f32.mrb[0].mxu0
    %v314 = vadd.f32 %v244, %v313
    %v315 = vpop.f32.mrb[0].mxu0
    %316 = vdwg.mxu0
    %317 = vmatprep.subr.mxu0 %v98
    %318 = vmatpush1.xpose.msra.mxu0 %v96
    %319 = vmatprep.subr.mxu0 0.0
    %320 = vmatpush1.xpose.msra.mxu0 0.0
    %321 = vmatprep.subr.mxu0 0.0
    %322 = vmatpush1.xpose.msra.mxu0 0.0
    %323 = vmatprep.subr.mxu0 0.0
    %324 = vmatpush1.xpose.msra.mxu0 0.0
    %325 = vmatprep.subr.mxu0 0.0
    %326 = vmatpush1.xpose.msra.mxu0 0.0
    %327 = vmatprep.subr.mxu0 0.0
    %328 = vmatpush1.xpose.msra.mxu0 0.0
    %329 = vmatprep.subr.mxu0 0.0
    %330 = vmatpush1.xpose.msra.mxu0 0.0
    %331 = vmatprep.subr.mxu0 0.0
    %332 = vmatpush1.xpose.msra.mxu0 0.0
    %333 = vmatprep.subr.mxu0 0.0
    %334 = vmatpush1.xpose.msra.mxu0 0.0
    %335 = vmatprep.subr.mxu0 0.0
    %336 = vmatpush1.xpose.msra.mxu0 0.0
    %337 = vmatprep.subr.mxu0 0.0
    %338 = vmatpush1.xpose.msra.mxu0 0.0
    %339 = vmatprep.subr.mxu0 0.0
    %340 = vmatpush1.xpose.msra.mxu0 0.0
    %341 = vmatprep.subr.mxu0 0.0
    %342 = vmatpush1.xpose.msra.mxu0 0.0
    %343 = vmatprep.subr.mxu0 0.0
    %344 = vmatpush1.xpose.msra.mxu0 0.0
    %345 = vmatprep.subr.mxu0 0.0
    %346 = vmatpush1.xpose.msra.mxu0 0.0
    %347 = vmatprep.subr.mxu0 0.0
    %348 = vmatpush1.xpose.msra.mxu0 0.0
    %349 = vmatprep.subr.mxu0 0.0
    %350 = vmatpush1.xpose.msra.mxu0 0.0
    %351 = vmatprep.subr.mxu0 0.0
    %352 = vmatpush1.xpose.msra.mxu0 0.0
    %353 = vmatprep.subr.mxu0 0.0
    %354 = vmatpush1.xpose.msra.mxu0 0.0
    %355 = vmatprep.subr.mxu0 0.0
    %356 = vmatpush1.xpose.msra.mxu0 0.0
    %357 = vmatprep.subr.mxu0 0.0
    %358 = vmatpush1.xpose.msra.mxu0 0.0
    %359 = vmatprep.subr.mxu0 0.0
    %360 = vmatpush1.xpose.msra.mxu0 0.0
    %361 = vmatprep.subr.mxu0 0.0
    %362 = vmatpush1.xpose.msra.mxu0 0.0
    %363 = vmatprep.subr.mxu0 0.0
    %364 = vmatpush1.xpose.msra.mxu0 0.0
    %365 = vmatprep.subr.mxu0 0.0
    %366 = vmatpush1.xpose.msra.mxu0 0.0
    %367 = vmatprep.subr.mxu0 0.0
    %368 = vmatpush1.xpose.msra.mxu0 0.0
    %369 = vmatprep.subr.mxu0 0.0
    %370 = vmatpush1.xpose.msra.mxu0 0.0
    %371 = vmatprep.subr.mxu0 0.0
    %372 = vmatpush1.xpose.msra.mxu0 0.0
    %373 = vmatprep.subr.mxu0 0.0
    %374 = vmatpush1.xpose.msra.mxu0 0.0
    %375 = vmatprep.subr.mxu0 0.0
    %376 = vmatpush1.xpose.msra.mxu0 0.0
    %377 = vmatprep.subr.mxu0 0.0
    %378 = vmatpush1.xpose.msra.mxu0 0.0
    %379 = vmatprep.subr.mxu0 0.0
    %380 = vmatpush1.xpose.msra.mxu0 0.0
    %381 = vmatprep.mubr.f32.mxu0 %v98
    %382 = vmatmul.mubr.f32.gmra.mrb[0].mxu0 %v96
    %v383 = vpop.f32.mrb[0].mxu0
    %v384 = vadd.f32 %v314, %v383
    %v385 = vpop.f32.mrb[0].mxu0
    %386 = vdwg.mxu0
    %v387 = vadd.f32 %v62, %v384
    %vm388 = vcmask 9216
    %389 = vst.msk [vmem:[#allocation7] sm:$0x3] %vm388, %v387
    %v390 = vld [vmem:[#allocation8] sm:$0x3]
    %v393 = vcombine.high %v60, %v60
    %v395 = vunpack.c.l.s4 1983009808
    %v396 = vunpack.c.0.s8 %v395
    %v397 = vlaneseq
    %v398 = vshrl.u32 %v397, 7
    %v399 = vsub.s32 %v396, %v398
    %v400 = vrot.slane %v60, %v399
    %v402 = vunpack.c.l.s4 1983009808
    %v403 = vunpack.c.0.s8 %v402
    %v404 = vlaneseq
    %v405 = vshrl.u32 %v404, 7
    %v406 = vsub.s32 %v403, %v405
    %v407 = vrot.slane %v393, %v406
    %v408 = vcombine.high %v400, %v400
    %v409 = vcombine.high %v407, %v407
    %v410 = vcombine.high %v61, %v61
    %v412 = vunpack.c.l.s4 1983009808
    %v413 = vunpack.c.0.s8 %v412
    %v414 = vlaneseq
    %v415 = vshrl.u32 %v414, 7
    %v416 = vsub.s32 %v413, %v415
    %v417 = vrot.slane %v61, %v416
    %v419 = vunpack.c.l.s4 1983009808
    %v420 = vunpack.c.0.s8 %v419
    %v421 = vlaneseq
    %v422 = vshrl.u32 %v421, 7
    %v423 = vsub.s32 %v420, %v422
    %v424 = vrot.slane %v410, %v423
    %v425 = vcombine.high %v417, %v417
    %v426 = vcombine.high %v424, %v424
    %435 = vmatprep.subr.mxu0 %v408
    %436 = vmatpush1.xpose.msra.mxu0 %v400
    %437 = vmatprep.subr.mxu0 0.0
    %438 = vmatpush1.xpose.msra.mxu0 0.0
    %439 = vmatprep.subr.mxu0 0.0
    %440 = vmatpush1.xpose.msra.mxu0 0.0
    %441 = vmatprep.subr.mxu0 0.0
    %442 = vmatpush1.xpose.msra.mxu0 0.0
    %443 = vmatprep.subr.mxu0 0.0
    %444 = vmatpush1.xpose.msra.mxu0 0.0
    %445 = vmatprep.subr.mxu0 0.0
    %446 = vmatpush1.xpose.msra.mxu0 0.0
    %447 = vmatprep.subr.mxu0 0.0
    %448 = vmatpush1.xpose.msra.mxu0 0.0
    %449 = vmatprep.subr.mxu0 0.0
    %450 = vmatpush1.xpose.msra.mxu0 0.0
    %451 = vmatprep.subr.mxu0 0.0
    %452 = vmatpush1.xpose.msra.mxu0 0.0
    %453 = vmatprep.subr.mxu0 0.0
    %454 = vmatpush1.xpose.msra.mxu0 0.0
    %455 = vmatprep.subr.mxu0 0.0
    %456 = vmatpush1.xpose.msra.mxu0 0.0
    %457 = vmatprep.subr.mxu0 0.0
    %458 = vmatpush1.xpose.msra.mxu0 0.0
    %459 = vmatprep.subr.mxu0 0.0
    %460 = vmatpush1.xpose.msra.mxu0 0.0
    %461 = vmatprep.subr.mxu0 0.0
    %462 = vmatpush1.xpose.msra.mxu0 0.0
    %463 = vmatprep.subr.mxu0 0.0
    %464 = vmatpush1.xpose.msra.mxu0 0.0
    %465 = vmatprep.subr.mxu0 0.0
    %466 = vmatpush1.xpose.msra.mxu0 0.0
    %467 = vmatprep.subr.mxu0 0.0
    %468 = vmatpush1.xpose.msra.mxu0 0.0
    %469 = vmatprep.subr.mxu0 0.0
    %470 = vmatpush1.xpose.msra.mxu0 0.0
    %471 = vmatprep.subr.mxu0 0.0
    %472 = vmatpush1.xpose.msra.mxu0 0.0
    %473 = vmatprep.subr.mxu0 0.0
    %474 = vmatpush1.xpose.msra.mxu0 0.0
    %475 = vmatprep.subr.mxu0 0.0
    %476 = vmatpush1.xpose.msra.mxu0 0.0
    %477 = vmatprep.subr.mxu0 0.0
    %478 = vmatpush1.xpose.msra.mxu0 0.0
    %479 = vmatprep.subr.mxu0 0.0
    %480 = vmatpush1.xpose.msra.mxu0 0.0
    %481 = vmatprep.subr.mxu0 0.0
    %482 = vmatpush1.xpose.msra.mxu0 0.0
    %483 = vmatprep.subr.mxu0 0.0
    %484 = vmatpush1.xpose.msra.mxu0 0.0
    %485 = vmatprep.subr.mxu0 0.0
    %486 = vmatpush1.xpose.msra.mxu0 0.0
    %487 = vmatprep.subr.mxu0 0.0
    %488 = vmatpush1.xpose.msra.mxu0 0.0
    %489 = vmatprep.subr.mxu0 0.0
    %490 = vmatpush1.xpose.msra.mxu0 0.0
    %491 = vmatprep.subr.mxu0 0.0
    %492 = vmatpush1.xpose.msra.mxu0 0.0
    %493 = vmatprep.subr.mxu0 0.0
    %494 = vmatpush1.xpose.msra.mxu0 0.0
    %495 = vmatprep.subr.mxu0 0.0
    %496 = vmatpush1.xpose.msra.mxu0 0.0
    %497 = vmatprep.subr.mxu0 0.0
    %498 = vmatpush1.xpose.msra.mxu0 0.0
    %499 = vmatprep.mubr.f32.mxu0 %v408
    %500 = vmatmul.mubr.f32.gmra.mrb[0].mxu0 %v400
    %v501 = vpop.f32.mrb[0].mxu0
    %v502 = vadd.f32 0.0, %v501
    %v503 = vpop.f32.mrb[0].mxu0
    %504 = vdwg.mxu0
    %505 = vmatprep.subr.mxu0 %v409
    %506 = vmatpush1.xpose.msra.mxu0 %v407
    %507 = vmatprep.subr.mxu0 0.0
    %508 = vmatpush1.xpose.msra.mxu0 0.0
    %509 = vmatprep.subr.mxu0 0.0
    %510 = vmatpush1.xpose.msra.mxu0 0.0
    %511 = vmatprep.subr.mxu0 0.0
    %512 = vmatpush1.xpose.msra.mxu0 0.0
    %513 = vmatprep.subr.mxu0 0.0
    %514 = vmatpush1.xpose.msra.mxu0 0.0
    %515 = vmatprep.subr.mxu0 0.0
    %516 = vmatpush1.xpose.msra.mxu0 0.0
    %517 = vmatprep.subr.mxu0 0.0
    %518 = vmatpush1.xpose.msra.mxu0 0.0
    %519 = vmatprep.subr.mxu0 0.0
    %520 = vmatpush1.xpose.msra.mxu0 0.0
    %521 = vmatprep.subr.mxu0 0.0
    %522 = vmatpush1.xpose.msra.mxu0 0.0
    %523 = vmatprep.subr.mxu0 0.0
    %524 = vmatpush1.xpose.msra.mxu0 0.0
    %525 = vmatprep.subr.mxu0 0.0
    %526 = vmatpush1.xpose.msra.mxu0 0.0
    %527 = vmatprep.subr.mxu0 0.0
    %528 = vmatpush1.xpose.msra.mxu0 0.0
    %529 = vmatprep.subr.mxu0 0.0
    %530 = vmatpush1.xpose.msra.mxu0 0.0
    %531 = vmatprep.subr.mxu0 0.0
    %532 = vmatpush1.xpose.msra.mxu0 0.0
    %533 = vmatprep.subr.mxu0 0.0
    %534 = vmatpush1.xpose.msra.mxu0 0.0
    %535 = vmatprep.subr.mxu0 0.0
    %536 = vmatpush1.xpose.msra.mxu0 0.0
    %537 = vmatprep.subr.mxu0 0.0
    %538 = vmatpush1.xpose.msra.mxu0 0.0
    %539 = vmatprep.subr.mxu0 0.0
    %540 = vmatpush1.xpose.msra.mxu0 0.0
    %541 = vmatprep.subr.mxu0 0.0
    %542 = vmatpush1.xpose.msra.mxu0 0.0
    %543 = vmatprep.subr.mxu0 0.0
    %544 = vmatpush1.xpose.msra.mxu0 0.0
    %545 = vmatprep.subr.mxu0 0.0
    %546 = vmatpush1.xpose.msra.mxu0 0.0
    %547 = vmatprep.subr.mxu0 0.0
    %548 = vmatpush1.xpose.msra.mxu0 0.0
    %549 = vmatprep.subr.mxu0 0.0
    %550 = vmatpush1.xpose.msra.mxu0 0.0
    %551 = vmatprep.subr.mxu0 0.0
    %552 = vmatpush1.xpose.msra.mxu0 0.0
    %553 = vmatprep.subr.mxu0 0.0
    %554 = vmatpush1.xpose.msra.mxu0 0.0
    %555 = vmatprep.subr.mxu0 0.0
    %556 = vmatpush1.xpose.msra.mxu0 0.0
    %557 = vmatprep.subr.mxu0 0.0
    %558 = vmatpush1.xpose.msra.mxu0 0.0
    %559 = vmatprep.subr.mxu0 0.0
    %560 = vmatpush1.xpose.msra.mxu0 0.0
    %561 = vmatprep.subr.mxu0 0.0
    %562 = vmatpush1.xpose.msra.mxu0 0.0
    %563 = vmatprep.subr.mxu0 0.0
    %564 = vmatpush1.xpose.msra.mxu0 0.0
    %565 = vmatprep.subr.mxu0 0.0
    %566 = vmatpush1.xpose.msra.mxu0 0.0
    %567 = vmatprep.subr.mxu0 0.0
    %568 = vmatpush1.xpose.msra.mxu0 0.0
    %569 = vmatprep.mubr.f32.mxu0 %v409
    %570 = vmatmul.mubr.f32.gmra.mrb[0].mxu0 %v407
    %v571 = vpop.f32.mrb[0].mxu0
    %v572 = vadd.f32 %v502, %v571
    %v573 = vpop.f32.mrb[0].mxu0
    %574 = vdwg.mxu0
    %575 = vmatprep.subr.mxu0 %v425
    %576 = vmatpush1.xpose.msra.mxu0 %v417
    %577 = vmatprep.subr.mxu0 0.0
    %578 = vmatpush1.xpose.msra.mxu0 0.0
    %579 = vmatprep.subr.mxu0 0.0
    %580 = vmatpush1.xpose.msra.mxu0 0.0
    %581 = vmatprep.subr.mxu0 0.0
    %582 = vmatpush1.xpose.msra.mxu0 0.0
    %583 = vmatprep.subr.mxu0 0.0
    %584 = vmatpush1.xpose.msra.mxu0 0.0
    %585 = vmatprep.subr.mxu0 0.0
    %586 = vmatpush1.xpose.msra.mxu0 0.0
    %587 = vmatprep.subr.mxu0 0.0
    %588 = vmatpush1.xpose.msra.mxu0 0.0
    %589 = vmatprep.subr.mxu0 0.0
    %590 = vmatpush1.xpose.msra.mxu0 0.0
    %591 = vmatprep.subr.mxu0 0.0
    %592 = vmatpush1.xpose.msra.mxu0 0.0
    %593 = vmatprep.subr.mxu0 0.0
    %594 = vmatpush1.xpose.msra.mxu0 0.0
    %595 = vmatprep.subr.mxu0 0.0
    %596 = vmatpush1.xpose.msra.mxu0 0.0
    %597 = vmatprep.subr.mxu0 0.0
    %598 = vmatpush1.xpose.msra.mxu0 0.0
    %599 = vmatprep.subr.mxu0 0.0
    %600 = vmatpush1.xpose.msra.mxu0 0.0
    %601 = vmatprep.subr.mxu0 0.0
    %602 = vmatpush1.xpose.msra.mxu0 0.0
    %603 = vmatprep.subr.mxu0 0.0
    %604 = vmatpush1.xpose.msra.mxu0 0.0
    %605 = vmatprep.subr.mxu0 0.0
    %606 = vmatpush1.xpose.msra.mxu0 0.0
    %607 = vmatprep.subr.mxu0 0.0
    %608 = vmatpush1.xpose.msra.mxu0 0.0
    %609 = vmatprep.subr.mxu0 0.0
    %610 = vmatpush1.xpose.msra.mxu0 0.0
    %611 = vmatprep.subr.mxu0 0.0
    %612 = vmatpush1.xpose.msra.mxu0 0.0
    %613 = vmatprep.subr.mxu0 0.0
    %614 = vmatpush1.xpose.msra.mxu0 0.0
    %615 = vmatprep.subr.mxu0 0.0
    %616 = vmatpush1.xpose.msra.mxu0 0.0
    %617 = vmatprep.subr.mxu0 0.0
    %618 = vmatpush1.xpose.msra.mxu0 0.0
    %619 = vmatprep.subr.mxu0 0.0
    %620 = vmatpush1.xpose.msra.mxu0 0.0
    %621 = vmatprep.subr.mxu0 0.0
    %622 = vmatpush1.xpose.msra.mxu0 0.0
    %623 = vmatprep.subr.mxu0 0.0
    %624 = vmatpush1.xpose.msra.mxu0 0.0
    %625 = vmatprep.subr.mxu0 0.0
    %626 = vmatpush1.xpose.msra.mxu0 0.0
    %627 = vmatprep.subr.mxu0 0.0
    %628 = vmatpush1.xpose.msra.mxu0 0.0
    %629 = vmatprep.subr.mxu0 0.0
    %630 = vmatpush1.xpose.msra.mxu0 0.0
    %631 = vmatprep.subr.mxu0 0.0
    %632 = vmatpush1.xpose.msra.mxu0 0.0
    %633 = vmatprep.subr.mxu0 0.0
    %634 = vmatpush1.xpose.msra.mxu0 0.0
    %635 = vmatprep.subr.mxu0 0.0
    %636 = vmatpush1.xpose.msra.mxu0 0.0
    %637 = vmatprep.subr.mxu0 0.0
    %638 = vmatpush1.xpose.msra.mxu0 0.0
    %639 = vmatprep.mubr.f32.mxu0 %v425
    %640 = vmatmul.mubr.f32.gmra.mrb[0].mxu0 %v417
    %v641 = vpop.f32.mrb[0].mxu0
    %v642 = vadd.f32 %v572, %v641
    %v643 = vpop.f32.mrb[0].mxu0
    %644 = vdwg.mxu0
    %645 = vmatprep.subr.mxu0 %v426
    %646 = vmatpush1.xpose.msra.mxu0 %v424
    %647 = vmatprep.subr.mxu0 0.0
    %648 = vmatpush1.xpose.msra.mxu0 0.0
    %649 = vmatprep.subr.mxu0 0.0
    %650 = vmatpush1.xpose.msra.mxu0 0.0
    %651 = vmatprep.subr.mxu0 0.0
    %652 = vmatpush1.xpose.msra.mxu0 0.0
    %653 = vmatprep.subr.mxu0 0.0
    %654 = vmatpush1.xpose.msra.mxu0 0.0
    %655 = vmatprep.subr.mxu0 0.0
    %656 = vmatpush1.xpose.msra.mxu0 0.0
    %657 = vmatprep.subr.mxu0 0.0
    %658 = vmatpush1.xpose.msra.mxu0 0.0
    %659 = vmatprep.subr.mxu0 0.0
    %660 = vmatpush1.xpose.msra.mxu0 0.0
    %661 = vmatprep.subr.mxu0 0.0
    %662 = vmatpush1.xpose.msra.mxu0 0.0
    %663 = vmatprep.subr.mxu0 0.0
    %664 = vmatpush1.xpose.msra.mxu0 0.0
    %665 = vmatprep.subr.mxu0 0.0
    %666 = vmatpush1.xpose.msra.mxu0 0.0
    %667 = vmatprep.subr.mxu0 0.0
    %668 = vmatpush1.xpose.msra.mxu0 0.0
    %669 = vmatprep.subr.mxu0 0.0
    %670 = vmatpush1.xpose.msra.mxu0 0.0
    %671 = vmatprep.subr.mxu0 0.0
    %672 = vmatpush1.xpose.msra.mxu0 0.0
    %673 = vmatprep.subr.mxu0 0.0
    %674 = vmatpush1.xpose.msra.mxu0 0.0
    %675 = vmatprep.subr.mxu0 0.0
    %676 = vmatpush1.xpose.msra.mxu0 0.0
    %677 = vmatprep.subr.mxu0 0.0
    %678 = vmatpush1.xpose.msra.mxu0 0.0
    %679 = vmatprep.subr.mxu0 0.0
    %680 = vmatpush1.xpose.msra.mxu0 0.0
    %681 = vmatprep.subr.mxu0 0.0
    %682 = vmatpush1.xpose.msra.mxu0 0.0
    %683 = vmatprep.subr.mxu0 0.0
    %684 = vmatpush1.xpose.msra.mxu0 0.0
    %685 = vmatprep.subr.mxu0 0.0
    %686 = vmatpush1.xpose.msra.mxu0 0.0
    %687 = vmatprep.subr.mxu0 0.0
    %688 = vmatpush1.xpose.msra.mxu0 0.0
    %689 = vmatprep.subr.mxu0 0.0
    %690 = vmatpush1.xpose.msra.mxu0 0.0
    %691 = vmatprep.subr.mxu0 0.0
    %692 = vmatpush1.xpose.msra.mxu0 0.0
    %693 = vmatprep.subr.mxu0 0.0
    %694 = vmatpush1.xpose.msra.mxu0 0.0
    %695 = vmatprep.subr.mxu0 0.0
    %696 = vmatpush1.xpose.msra.mxu0 0.0
    %697 = vmatprep.subr.mxu0 0.0
    %698 = vmatpush1.xpose.msra.mxu0 0.0
    %699 = vmatprep.subr.mxu0 0.0
    %700 = vmatpush1.xpose.msra.mxu0 0.0
    %701 = vmatprep.subr.mxu0 0.0
    %702 = vmatpush1.xpose.msra.mxu0 0.0
    %703 = vmatprep.subr.mxu0 0.0
    %704 = vmatpush1.xpose.msra.mxu0 0.0
    %705 = vmatprep.subr.mxu0 0.0
    %706 = vmatpush1.xpose.msra.mxu0 0.0
    %707 = vmatprep.subr.mxu0 0.0
    %708 = vmatpush1.xpose.msra.mxu0 0.0
    %709 = vmatprep.mubr.f32.mxu0 %v426
    %710 = vmatmul.mubr.f32.gmra.mrb[0].mxu0 %v424
    %v711 = vpop.f32.mrb[0].mxu0
    %v712 = vadd.f32 %v642, %v711
    %v713 = vpop.f32.mrb[0].mxu0
    %714 = vdwg.mxu0
    %v715 = vadd.f32 %v390, %v712
    %716 = vst.msk [vmem:[#allocation8] sm:$0x3] %vm388, %v715
    // Predicated region
    $region22: #{tpu_custom_call.1} parent=1 // pred_check
      _
    $region23: #{tpu_custom_call.1} parent=1 // pred_check_branch
      %718 = sbr.rel (0) target = $region25
    $region24: #{tpu_custom_call.1} parent=1 // pred_region
      %s720 = ssub.s32 32, 32
      %721 = vsyncadd [#allocation4], %s720
      %s723 = sshll.u32 [#allocation7], 4
      %s724 = int_to_ptr.vmem [resolvable:$true] %s723
      %726 = dma.vmem_to_hbm [thread:$0]  %s724, 32, %s2, [#allocation4]
    $region25: #{tpu_custom_call.1} parent=1 // pred_fallthru
      _
    // Predicated region
    $region26: #{tpu_custom_call.1} parent=1 // pred_check
      _
    $region27: #{tpu_custom_call.1} parent=1 // pred_check_branch
      %728 = sbr.rel (0) target = $region29
    $region28: #{tpu_custom_call.1} parent=1 // pred_region
      %s730 = ssub.s32 32, 32
      %731 = vsyncadd [#allocation9], %s730
      %s733 = sshll.u32 [#allocation8], 4
      %s734 = int_to_ptr.vmem [resolvable:$true] %s733
      %736 = dma.vmem_to_hbm [thread:$0]  %s734, 32, %s3, [#allocation9]
    $region29: #{tpu_custom_call.1} parent=1 // pred_fallthru
      _
    // Predicated region
    $region30: #{tpu_custom_call.1} parent=1 // pred_check
      _
    $region31: #{tpu_custom_call.1} parent=1 // pred_check_branch
      %738 = sbr.rel (0) target = $region33
    $region32: #{tpu_custom_call.1} parent=1 // pred_region
      %739 = dma.done [#allocation4], 32
    $region33: #{tpu_custom_call.1} parent=1 // pred_fallthru
      _
    // Predicated region
    $region34: #{tpu_custom_call.1} parent=1 // pred_check
      _
    $region35: #{tpu_custom_call.1} parent=1 // pred_check_branch
      %741 = sbr.rel (0) target = $region37
    $region36: #{tpu_custom_call.1} parent=1 // pred_region
      %742 = dma.done [#allocation9], 32
    $region37: #{tpu_custom_call.1} parent=1 // pred_fallthru
      _
    %743 = vsyncpa [#allocation3], 1
    %744 = vsyncpa [#allocation6], 1
    %745 = vsyncpa [#allocation4], 1
    %746 = vsyncpa [#allocation9], 1

</llo_original>
